<compile_context>
chip_gen: v7x
topology: tpu7x:2x2x1
jax: 0.10.0
libtpu: 0.0.40
codegen_flags: <defaults>
</compile_context>

<pallas_src>
import jax
import jax.numpy as jnp
from jax.experimental import pallas as pl
from jax.experimental.pallas import tpu as pltpu


# ---------------------------------------------------------------------------
# Pallas kernel: one row-tile of the im2col matmul, bias fused in the epilogue
# ---------------------------------------------------------------------------
def _patch_embed_kernel(x_ref, w_ref, b_ref, o_ref):
    """x_ref: (tm, K)  im2col'd patch rows
       w_ref: (K, E)   flattened conv weight
       b_ref: (1, E)   bias (f32)
       o_ref: (tm, E)  output rows
    """
    acc = jnp.dot(x_ref[...], w_ref[...], preferred_element_type=jnp.float32)
    o_ref[...] = (acc + b_ref[...].astype(jnp.float32)).astype(o_ref.dtype)


# ---------------------------------------------------------------------------
# Tiling policy
# ---------------------------------------------------------------------------
def _round_up(x: int, m: int) -> int:
    return ((x + m - 1) // m) * m


def _choose_row_tile(m: int, k: int, e: int,
                     x_itemsize: int, w_itemsize: int, out_itemsize: int,
                     vmem_budget_bytes: int = 24 * 1024 * 1024,
                     cap: int = 2048) -> int:
    """VMEM-derived row tile: multiple of 8, capped, and clamped so the grid
    has >= 2 steps whenever possible (DMA pipelining + v7x megacore)."""
    # Weight + bias blocks are grid-invariant but still double-buffered by the
    # default pipeline; account for both copies.
    fixed = 2 * (k * e * w_itemsize + e * 4)
    avail = max(vmem_budget_bytes - fixed, 1 * 1024 * 1024)
    # Double-buffered x tile and output tile dominate the per-row cost.
    per_row = 2 * (k * x_itemsize + e * out_itemsize)
    tm = min(cap, avail // per_row)
    tm = max(8, (int(tm) // 8) * 8)
    if m > 8:
        # Ensure >= 2 grid steps so Pallas can pipeline and v7x can use both TCs.
        half_rows = _round_up(pl.cdiv(m, 2), 8)
        tm = min(tm, half_rows)
    return int(max(tm, 8))


# ---------------------------------------------------------------------------
# Wrapper
# ---------------------------------------------------------------------------
def patch_embedding(x_nchw, w_oihw, bias, patch_size, *,
                    compute_dtype=jnp.bfloat16, out_dtype=jnp.float32):
    """PyTorch PatchEmbedding.forward.

    x_nchw: (N, Cin, H, W)   input image (NCHW, matching the PyTorch module)
    w_oihw: (E, Cin, P, P)   nn.Conv2d weight
    bias:   (E,)             nn.Conv2d bias
    returns (N, num_patches, E) == proj(x).flatten(2).transpose(1, 2)

    compute_dtype: MXU input dtype (default bf16; accumulation is always f32).
    out_dtype:     output dtype (default f32 to match the PyTorch module).
    """
    N, C, H, W = x_nchw.shape
    E = w_oihw.shape[0]
    P = patch_size
    Hc, Wc = H // P, W // P
    num_patches = Hc * Wc

    # Match nn.Conv2d(stride=P): silently drop remainder rows/cols.
    x_nchw = x_nchw[:, :, :Hc * P, :Wc * P]

    # Cast BEFORE the im2col transposes so the extra HBM round trip of the
    # image runs at compute_dtype width.
    x_c = x_nchw.astype(compute_dtype)
    w_c = w_oihw.astype(compute_dtype)

    # --- layout glue: im2col of the non-overlapping P x P patches -----------
    x_nhwc = jnp.transpose(x_c, (0, 2, 3, 1))                   # (N,H,W,C)
    x_cols = x_nhwc.reshape(N, Hc, P, Wc, P, C)
    x_cols = jnp.transpose(x_cols, (0, 1, 3, 2, 4, 5))          # (N,Hc,Wc,P,P,C)
    x_cols = x_cols.reshape(N * num_patches, P * P * C)         # (M, K)

    # conv weight (E,C,P,P) -> (P,P,C,E) -> (K,E), matching the im2col order
    w_mat = jnp.transpose(w_c, (2, 3, 1, 0)).reshape(P * P * C, E)
    b_row = bias.reshape(1, E).astype(jnp.float32)

    M, K = x_cols.shape

    # Pad the contraction dim to a lane-aligned multiple of 128 (zeros don't
    # change the matmul; keeps the MXU contraction passes fully utilized).
    K_pad = _round_up(K, 128)
    if K_pad != K:
        x_cols = jnp.pad(x_cols, ((0, 0), (0, K_pad - K)))
        w_mat = jnp.pad(w_mat, ((0, K_pad - K), (0, 0)))

    x_itemsize = jnp.dtype(compute_dtype).itemsize
    out_itemsize = jnp.dtype(out_dtype).itemsize
    tm = _choose_row_tile(M, K_pad, E, x_itemsize, x_itemsize, out_itemsize)
    grid = (pl.cdiv(M, tm),)   # last block may be partial; stores are masked

    cost = pl.CostEstimate(
        flops=2 * M * K_pad * E,
        transcendentals=0,
        bytes_accessed=(M * K_pad * x_itemsize + K_pad * E * x_itemsize
                        + E * 4 + M * E * out_itemsize),
    )

    out = pl.pallas_call(
        _patch_embed_kernel,
        out_shape=jax.ShapeDtypeStruct((M, E), out_dtype),
        grid_spec=pltpu.PrefetchScalarGridSpec(
            num_scalar_prefetch=0,
            grid=grid,
            in_specs=[
                pl.BlockSpec((tm, K_pad), lambda i: (i, 0)),   # patch rows (tiled)
                pl.BlockSpec((K_pad, E), lambda i: (0, 0)),    # weight (resident)
                pl.BlockSpec((1, E), lambda i: (0, 0)),        # bias   (resident)
            ],
            out_specs=pl.BlockSpec((tm, E), lambda i: (i, 0)),
        ),
        compiler_params=pltpu.CompilerParams(
            dimension_semantics=("parallel",),
            vmem_limit_bytes=48 * 1024 * 1024,
        ),
        cost_estimate=cost,
    )(x_cols, w_mat, b_row)

    return out.reshape(N, num_patches, E)


# ---------------------------------------------------------------------------
# Pure-XLA reference (for correctness check only)
# ---------------------------------------------------------------------------
def _reference(x_nchw, w_oihw, bias, patch_size):
    N, C, H, W = x_nchw.shape
    E = w_oihw.shape[0]
    P = patch_size
    y = jax.lax.conv_general_dilated(
        x_nchw, w_oihw, window_strides=(P, P), padding="VALID",
        dimension_numbers=("NCHW", "OIHW", "NCHW"))
    y = y + bias.reshape(1, E, 1, 1)
    num_patches = (H // P) * (W // P)
    return jnp.transpose(y.reshape(N, E, num_patches), (0, 2, 1))


# ---------------------------------------------------------------------------
# Main
# ---------------------------------------------------------------------------
if __name__ == "__main__":
    key = jax.random.PRNGKey(0)
    k1, k2, k3, k4, k5, k6 = jax.random.split(key, 6)

    # Case 1: batch=2, in_channels=4, img_size=16, patch_size=4, embed_dim=128.
    N, C, H, P, E = 2, 4, 16, 4, 128
    x = jax.random.normal(k1, (N, C, H, H), jnp.float32)
    w = jax.random.normal(k2, (E, C, P, P), jnp.float32) / jnp.sqrt(C * P * P)
    b = 0.01 * jax.random.normal(k3, (E,), jnp.float32)

    ref = jax.block_until_ready(_reference(x, w, b, P))

    # Default path: bf16 MXU inputs, f32 accumulation, f32 output.
    out = jax.block_until_ready(patch_embedding(x, w, b, P))
    assert out.shape == (N, (H // P) ** 2, E), out.shape
    assert bool(jnp.all(jnp.isfinite(out)))
    assert bool(jnp.allclose(out, ref, rtol=5e-2, atol=5e-2))

    # Full-f32 path: tight check against the XLA conv reference.
    out_f32 = jax.block_until_ready(
        patch_embedding(x, w, b, P, compute_dtype=jnp.float32))
    assert bool(jnp.allclose(out_f32, ref, rtol=1e-4, atol=1e-4))

    # Case 2: odd sizes — PyTorch-style crop (13 -> 12), K=48 padded to 128,
    # M=27 exercises the partial last row block of the cdiv grid.
    N2, C2, H2, P2, E2 = 3, 3, 13, 4, 128
    x2 = jax.random.normal(k4, (N2, C2, H2, H2), jnp.float32)
    w2 = jax.random.normal(k5, (E2, C2, P2, P2), jnp.float32) / jnp.sqrt(C2 * P2 * P2)
    b2 = 0.01 * jax.random.normal(k6, (E2,), jnp.float32)
    ref2 = jax.block_until_ready(_reference(x2, w2, b2, P2))
    out2 = jax.block_until_ready(
        patch_embedding(x2, w2, b2, P2, compute_dtype=jnp.float32))
    assert out2.shape == ref2.shape, (out2.shape, ref2.shape)
    assert bool(jnp.all(jnp.isfinite(out2)))
    assert bool(jnp.allclose(out2, ref2, rtol=1e-4, atol=1e-4))

    print("KERNEL_OK")
</pallas_src>

<mosaic_0001>
module attributes {stable_mosaic.version = 11 : i64} {
  func.func @_patch_embed_kernel(%arg0: i32, %arg1: memref<16x128xbf16, #tpu.memory_space<vmem>>, %arg2: memref<128x128xbf16, #tpu.memory_space<vmem>>, %arg3: memref<1x128xf32, #tpu.memory_space<vmem>>, %arg4: memref<16x128xf32, #tpu.memory_space<vmem>>) attributes {dimension_semantics = [#tpu.dimension_semantics<parallel>], iteration_bounds = array<i64: 2>, scalar_prefetch = 0 : i64, scratch_operands = 0 : i64, tpu.core_type = #tpu.core_type<tc>, window_params = [{transform_indices = @transform_0, window_bounds = array<i64: 16, 128>}, {pipeline_mode = #tpu.pipeline_mode<synchronous>, transform_indices = @transform_1, window_bounds = array<i64: 128, 128>}, {pipeline_mode = #tpu.pipeline_mode<synchronous>, transform_indices = @transform_2, window_bounds = array<i64: 1, 128>}, {transform_indices = @transform_3, window_bounds = array<i64: 16, 128>}]} {
    %c0 = arith.constant 0 : index
    %c0_0 = arith.constant 0 : index
    %0 = vector.load %arg1[%c0, %c0_0] : memref<16x128xbf16, #tpu.memory_space<vmem>>, vector<16x128xbf16>
    %c0_1 = arith.constant 0 : index
    %c0_2 = arith.constant 0 : index
    %1 = vector.load %arg2[%c0_1, %c0_2] : memref<128x128xbf16, #tpu.memory_space<vmem>>, vector<128x128xbf16>
    %cst = arith.constant dense<0.000000e+00> : vector<16x128xf32>
    %2 = tpu.matmul %0, %1, %cst {dimension_numbers = #tpu.dot_dimension_numbers<[1], [0], [0], [1], [0, 0, 1, 1], [], []>} : vector<16x128xbf16>, vector<128x128xbf16>, vector<16x128xf32> -> vector<16x128xf32>
    %c0_3 = arith.constant 0 : index
    %c0_4 = arith.constant 0 : index
    %3 = vector.load %arg3[%c0_3, %c0_4] : memref<1x128xf32, #tpu.memory_space<vmem>>, vector<1x128xf32>
    %4 = vector.broadcast %3 : vector<1x128xf32> to vector<16x128xf32>
    %5 = arith.addf %2, %4 : vector<16x128xf32>
    %c0_5 = arith.constant 0 : index
    %c0_6 = arith.constant 0 : index
    %6 = vector.load %arg4[%c0_5, %c0_6] : memref<16x128xf32, #tpu.memory_space<vmem>>, vector<16x128xf32>
    tpu.vector_store %arg4[%c0_5, %c0_6], %5 {strides = array<i32>} : memref<16x128xf32, #tpu.memory_space<vmem>>, vector<16x128xf32>,
    return
  }
  func.func @transform_0(%arg0: i32) -> (i32, i32) {
    %c0_i32 = arith.constant 0 : i32
    %c0_i32_0 = arith.constant 0 : i32
    return %arg0, %c0_i32 : i32, i32
  }
  func.func @transform_1(%arg0: i32) -> (i32, i32) {
    %c0_i32 = arith.constant 0 : i32
    %c0_i32_0 = arith.constant 0 : i32
    %c0_i32_1 = arith.constant 0 : i32
    return %c0_i32, %c0_i32_0 : i32, i32
  }
  func.func @transform_2(%arg0: i32) -> (i32, i32) {
    %c0_i32 = arith.constant 0 : i32
    %c0_i32_0 = arith.constant 0 : i32
    %c0_i32_1 = arith.constant 0 : i32
    return %c0_i32, %c0_i32_0 : i32, i32
  }
  func.func @transform_3(%arg0: i32) -> (i32, i32) {
    %c0_i32 = arith.constant 0 : i32
    %c0_i32_0 = arith.constant 0 : i32
    return %arg0, %c0_i32 : i32, i32
  }
}

</mosaic_0001>

<llo_original>
// kernel: tpu_custom_call.1
$region0: #{tpu_custom_call.1}
  #allocation0 [shape = 'u32[]', space=smem, size = 0x4, offset = 0x4, fixed_abs, tag = 'smem constant byte address 0x4 - core index']
  #allocation1 [shape = 'u32[144,128]{1,0:T(1,128)}', space=vmem, size = 0x12000, scoped, tag = 'internal scratch']
  %s0 = inlined_call_operand.hbm [shape: bf16[32,128], index: 0, kind: input, shape index: {}]
  %s1 = inlined_call_operand.hbm [shape: bf16[128,128], index: 1, kind: input, shape index: {}]
  %s2 = inlined_call_operand.vmem [shape: f32[1,128], index: 2, kind: input, shape index: {}]
  %s3 = inlined_call_operand.hbm [shape: f32[32,128], index: 3, kind: output, shape index: {}]
  %s4 = sld [smem:[#allocation0]]
  $region53: #{tpu_custom_call.1} parent=0
    _
  %s6 = ssub.s32 1, %s4
  %s7 = scalar_select 0, %s6, %s4
  $region1: #{tpu_custom_call.1} parent=0
    #allocation2 [shape = 'u8[8192]{0}', space=vmem, size = 0x2000, scoped, tag = 'input window, operand 0']
    #allocation3 [shape = 's32[2]{0}', space=sflag, size = 0x8, scoped, tag = 'scoped memory for tpu_custom_call.1']
    #allocation4 [shape = 's32[2]{0}', space=sflag, size = 0x8, scoped, tag = 'scoped memory for tpu_custom_call.1']
    #allocation5 [shape = 'u8[32768]{0}', space=vmem, size = 0x8000, scoped, tag = 'input window, operand 1, single buffered']
    #allocation6 [shape = 's32[1]{0}', space=sflag, size = 0x4, scoped, tag = 'scoped memory for tpu_custom_call.1']
    #allocation7 [shape = 'u8[16384]{0}', space=vmem, size = 0x4000, scoped, tag = 'output window, operand 0']
    %8 = vsyncpa [#allocation3], 0
    %s9 = scalar_lea.sflag [#allocation3], 1
    %10 = vsyncpa %s9, 0
    %11 = vsyncpa [#allocation6], 0
    %12 = vsyncpa [#allocation4], 0
    %s13 = scalar_lea.sflag [#allocation4], 1
    %14 = vsyncpa %s13, 0
    loop: start=0, step=1, limit=4
    $region2: #{tpu_custom_call.1} parent=1 // loop_pre_header
      _
    $region3: #{tpu_custom_call.1} parent=1 // loop_header
      %s16 = sphi 0, %s20
      %p17 = scmp.ge.s32.totalorder %s16, 4
      %s26 = sphi 0, %s28
      %s29 = sphi 0, %s26
      %s30 = sphi 0, %s29
      %s46 = sphi 0, %s30
      %s50 = sphi 0, %s50
      %s52 = sphi 0, %s50
      %s53 = sphi 0, %s52
      %s67 = sphi 0, %s53
      %s71 = sphi 0, %s71
      %s73 = sphi 0, %s71
      %s74 = sphi 0, %s73
      %s88 = sphi 0, %s74
      %s94 = sphi 0, %s96
      %s97 = sphi 0, %s94
      %s98 = sphi 0, %s97
      %s114 = sphi 0, %s98
    $region4: #{tpu_custom_call.1} parent=1 // loop_header_branch
      %19 = sbr.rel (%p17) target = $region8
    $region5: #{tpu_custom_call.1} parent=1 // loop_body
      %s21 = ssub.s32 %s16, 1
      %s22 = ssub.s32 %s16, 2
      %s23 = sadd.s32 %s16, 1
      %s24 = ssub.s32 %s16, %s23
      %p25 = scmp.eq.s32.totalorder %s24, 0
      %s27 = sadd.s32 %s26, 1
      %s28 = scalar_select %p25, %s26, %s27
      %p31 = pneg %p25
      %p32 = scmp.eq.s32.totalorder %s16, 1
      %p33 = por %p31, %p32
      %p34 = scmp.ne.s32.totalorder %s26, %s29
      %p35 = scmp.eq.s32.totalorder %s16, 0
      %p36 = por %p34, %p35
      %p37 = scmp.ne.s32.totalorder %s26, %s29
      %p38 = scmp.eq.s32.totalorder %s21, 1
      %p39 = por %p37, %p38
      %p40 = scmp.ne.s32.totalorder %s29, %s30
      %p41 = scmp.eq.s32.totalorder %s21, 0
      %p42 = por %p40, %p41
      %p43 = scmp.ne.s32.totalorder %s29, %s30
      %p44 = scmp.eq.s32.totalorder %s22, 1
      %p45 = por %p43, %p44
      %p47 = scmp.ne.s32.totalorder %s30, %s46
      %p48 = scmp.eq.s32.totalorder %s22, 0
      %p49 = por %p47, %p48
      %s51 = sadd.s32 %s50, 1
      %p54 = scmp.eq.s32.totalorder %s16, 1
      %p55 = scmp.ne.s32.totalorder %s50, %s52
      %p56 = scmp.eq.s32.totalorder %s16, 0
      %p57 = por %p55, %p56
      %p58 = scmp.ne.s32.totalorder %s50, %s52
      %p59 = scmp.eq.s32.totalorder %s21, 1
      %p60 = por %p58, %p59
      %p61 = scmp.ne.s32.totalorder %s52, %s53
      %p62 = scmp.eq.s32.totalorder %s21, 0
      %p63 = por %p61, %p62
      %p64 = scmp.ne.s32.totalorder %s52, %s53
      %p65 = scmp.eq.s32.totalorder %s22, 1
      %p66 = por %p64, %p65
      %p68 = scmp.ne.s32.totalorder %s53, %s67
      %p69 = scmp.eq.s32.totalorder %s22, 0
      %p70 = por %p68, %p69
      %s72 = sadd.s32 %s71, 1
      %p75 = scmp.eq.s32.totalorder %s16, 1
      %p76 = scmp.ne.s32.totalorder %s71, %s73
      %p77 = scmp.eq.s32.totalorder %s16, 0
      %p78 = por %p76, %p77
      %p79 = scmp.ne.s32.totalorder %s71, %s73
      %p80 = scmp.eq.s32.totalorder %s21, 1
      %p81 = por %p79, %p80
      %p82 = scmp.ne.s32.totalorder %s73, %s74
      %p83 = scmp.eq.s32.totalorder %s21, 0
      %p84 = por %p82, %p83
      %p85 = scmp.ne.s32.totalorder %s73, %s74
      %p86 = scmp.eq.s32.totalorder %s22, 1
      %p87 = por %p85, %p86
      %p89 = scmp.ne.s32.totalorder %s74, %s88
      %p90 = scmp.eq.s32.totalorder %s22, 0
      %p91 = por %p89, %p90
      %s92 = ssub.s32 %s16, %s23
      %p93 = scmp.eq.s32.totalorder %s92, 0
      %s95 = sadd.s32 %s94, 1
      %s96 = scalar_select %p93, %s94, %s95
      %p99 = pneg %p93
      %p100 = scmp.eq.s32.totalorder %s16, 1
      %p101 = por %p99, %p100
      %p102 = scmp.ne.s32.totalorder %s94, %s97
      %p103 = scmp.eq.s32.totalorder %s16, 0
      %p104 = por %p102, %p103
      %p105 = scmp.ne.s32.totalorder %s94, %s97
      %p106 = scmp.eq.s32.totalorder %s21, 1
      %p107 = por %p105, %p106
      %p108 = scmp.ne.s32.totalorder %s97, %s98
      %p109 = scmp.eq.s32.totalorder %s21, 0
      %p110 = por %p108, %p109
      %p111 = scmp.ne.s32.totalorder %s97, %s98
      %p112 = scmp.eq.s32.totalorder %s22, 1
      %p113 = por %p111, %p112
      %p115 = scmp.ne.s32.totalorder %s98, %s114
      %p116 = scmp.eq.s32.totalorder %s22, 0
      %p117 = por %p115, %p116
      %p118 = scmp.le.s32.totalorder 1, %s16
      %p119 = scmp.lt.s32.totalorder %s16, 3
      %p120 = pnand %p118, %p119
      %p121 = pneg %p120
      // Predicated region
      $region9: #{tpu_custom_call.1} parent=5 // pred_check
        _
      $region10: #{tpu_custom_call.1} parent=5 // pred_check_branch
        %123 = sbr.rel (%p120) target = $region12
      $region11: #{tpu_custom_call.1} parent=5 // pred_region
        %s124 = ssub.s32 %s16, 1
        // Predicated region
        $region13: #{tpu_custom_call.1} parent=11 // pred_check
          %p125 = pneg %p63
        $region14: #{tpu_custom_call.1} parent=11 // pred_check_branch
          %127 = sbr.rel (%p125) target = $region16
        $region15: #{tpu_custom_call.1} parent=11 // pred_region
          %s129 = ssub.s32 1024, 1024
          %130 = vsyncadd [#allocation6], %s129
          %s131 = sshll.u32 [#allocation5], 4
          %s132 = int_to_ptr.vmem [resolvable:$true] %s131
          %137 = dma.hbm_to_vmem [thread:$0]  %s1, 1024, %s132, [#allocation6], 64, 64, 4
        $region16: #{tpu_custom_call.1} parent=11 // pred_fallthru
          _
        // Predicated region
        $region17: #{tpu_custom_call.1} parent=11 // pred_check
          %p138 = pneg %p84
        $region18: #{tpu_custom_call.1} parent=11 // pred_check_branch
          %140 = sbr.rel (%p138) target = $region20
        $region19: #{tpu_custom_call.1} parent=11 // pred_region
          _
        $region20: #{tpu_custom_call.1} parent=11 // pred_fallthru
          _
      $region12: #{tpu_custom_call.1} parent=5 // pred_fallthru
        _
      %p141 = scmp.lt.s32.totalorder %s16, 2
      // Predicated region
      $region21: #{tpu_custom_call.1} parent=5 // pred_check
        %p142 = pneg %p141
      $region22: #{tpu_custom_call.1} parent=5 // pred_check_branch
        %144 = sbr.rel (%p142) target = $region24
      $region23: #{tpu_custom_call.1} parent=5 // pred_region
        // Predicated region
        $region25: #{tpu_custom_call.1} parent=23 // pred_check
          %p145 = pneg %p36
        $region26: #{tpu_custom_call.1} parent=23 // pred_check_branch
          %147 = sbr.rel (%p145) target = $region28
        $region27: #{tpu_custom_call.1} parent=23 // pred_region
          %s148 = sand.u32 %s26, 1
          %s149 = scalar_lea.sflag [#allocation3], %s148
          %s150 = sand.u32 %s26, 1
          %s151 = smul.addr %s150, 8
          %s152 = scalar_lea.vmem [#allocation2], %s151
          %s153 = smul.u32 2, %s16
          %s155 = ssub.s32 128, 128
          %156 = vsyncadd %s149, %s155
          %s157 = smul.addr %s153, 64
          %s158 = scalar_lea.hbm %s0, %s157
          %s159 = sshll.u32 %s152, 4
          %s160 = int_to_ptr.vmem [resolvable:$true] %s159
          %165 = dma.hbm_to_vmem [thread:$0]  %s158, 128, %s160, %s149, 64, 64, 4
        $region28: #{tpu_custom_call.1} parent=23 // pred_fallthru
          _
      $region24: #{tpu_custom_call.1} parent=5 // pred_fallthru
        _
      %p166 = scmp.le.s32.totalorder 1, %s16
      %p167 = scmp.lt.s32.totalorder %s16, 3
      %p168 = pnand %p166, %p167
      %p169 = pneg %p168
      // Predicated region
      $region29: #{tpu_custom_call.1} parent=5 // pred_check
        _
      $region30: #{tpu_custom_call.1} parent=5 // pred_check_branch
        %171 = sbr.rel (%p168) target = $region32
      $region31: #{tpu_custom_call.1} parent=5 // pred_region
        %s172 = ssub.s32 %s16, 1
        %s173 = sand.u32 %s29, 1
        %s174 = scalar_lea.sflag [#allocation3], %s173
        %s175 = sand.u32 %s29, 1
        %s176 = smul.addr %s175, 8
        %s177 = scalar_lea.vmem [#allocation2], %s176
        // Predicated region
        $region33: #{tpu_custom_call.1} parent=31 // pred_check
          %p178 = pneg %p42
        $region34: #{tpu_custom_call.1} parent=31 // pred_check_branch
          %180 = sbr.rel (%p178) target = $region36
        $region35: #{tpu_custom_call.1} parent=31 // pred_region
          %181 = dma.done %s174, 128
        $region36: #{tpu_custom_call.1} parent=31 // pred_fallthru
          _
        // Predicated region
        $region37: #{tpu_custom_call.1} parent=31 // pred_check
          %p182 = pneg %p63
        $region38: #{tpu_custom_call.1} parent=31 // pred_check_branch
          %184 = sbr.rel (%p182) target = $region40
        $region39: #{tpu_custom_call.1} parent=31 // pred_region
          %185 = dma.done [#allocation6], 1024
        $region40: #{tpu_custom_call.1} parent=31 // pred_fallthru
          _
        %s186 = sand.u32 %s29, 1
        %s187 = scalar_lea.sflag [#allocation3], %s186
        %s188 = sand.u32 %s29, 1
        %s189 = smul.addr %s188, 8
        %s190 = scalar_lea.vmem [#allocation2], %s189
        %p191 = pneg %p42
        %p192 = pneg %p39
        %p193 = pneg %p63
        %p194 = pneg %p60
        %p195 = pneg %p84
        %p196 = pneg %p81
        %p197 = pneg %p110
        %p198 = pneg %p107
        %s199 = sand.u32 %s97, 1
        %s200 = scalar_lea.sflag [#allocation4], %s199
        %s201 = sand.u32 %s97, 1
        %s202 = smul.addr %s201, 16
        %s203 = scalar_lea.vmem [#allocation7], %s202
        %s204 = smul.u32 2, %s21
        %s205 = smul.u32 2, %s21
        %v207 = vld [vmem:[%s177] sm:$0xf]
        %v208 = vld [vmem:[%s177 + $0x4] sm:$0xf]
        %v209 = vld [vmem:[#allocation5] sm:$0xf]
        %v210 = vld [vmem:[#allocation5 + $0x4] sm:$0xf]
        %v211 = vld [vmem:[#allocation5 + $0x8] sm:$0xf]
        %v212 = vld [vmem:[#allocation5 + $0xc] sm:$0xf]
        %v213 = vld [vmem:[#allocation5 + $0x10] sm:$0xf]
        %v214 = vld [vmem:[#allocation5 + $0x14] sm:$0xf]
        %v215 = vld [vmem:[#allocation5 + $0x18] sm:$0xf]
        %v216 = vld [vmem:[#allocation5 + $0x1c] sm:$0xf]
        %v217 = vld [vmem:[#allocation5 + $0x20] sm:$0xf]
        %v218 = vld [vmem:[#allocation5 + $0x24] sm:$0xf]
        %v219 = vld [vmem:[#allocation5 + $0x28] sm:$0xf]
        %v220 = vld [vmem:[#allocation5 + $0x2c] sm:$0xf]
        %v221 = vld [vmem:[#allocation5 + $0x30] sm:$0xf]
        %v222 = vld [vmem:[#allocation5 + $0x34] sm:$0xf]
        %v223 = vld [vmem:[#allocation5 + $0x38] sm:$0xf]
        %v224 = vld [vmem:[#allocation5 + $0x3c] sm:$0xf]
        %v225 = vld [vmem:[%s2] sm:$0x1]
        %v227 = vlaneseq
        %v228 = vshrl.u32 %v227, 7
        %v229 = vsub.s32 0, %v228
        %v230 = vrot.slane %v225, %v229
        %v234 = vunpack.c.l.b16 %v207
        %v235 = vunpack.c.l.b16 %v208
        %v236 = vpack.c.b16 %v235, %v234
        %v254 = vunpack.c.l.b16 %v209
        %v255 = vunpack.c.l.b16 %v210
        %v256 = vunpack.c.l.b16 %v211
        %v257 = vunpack.c.l.b16 %v212
        %v258 = vunpack.c.l.b16 %v213
        %v259 = vunpack.c.l.b16 %v214
        %v260 = vunpack.c.l.b16 %v215
        %v261 = vunpack.c.l.b16 %v216
        %v262 = vunpack.c.l.b16 %v217
        %v263 = vunpack.c.l.b16 %v218
        %v264 = vunpack.c.l.b16 %v219
        %v265 = vunpack.c.l.b16 %v220
        %v266 = vunpack.c.l.b16 %v221
        %v267 = vunpack.c.l.b16 %v222
        %v268 = vunpack.c.l.b16 %v223
        %v269 = vunpack.c.l.b16 %v224
        %v270 = vpack.c.b16 %v255, %v254
        %v271 = vpack.c.b16 %v257, %v256
        %v272 = vpack.c.b16 %v259, %v258
        %v273 = vpack.c.b16 %v261, %v260
        %v274 = vpack.c.b16 %v263, %v262
        %v275 = vpack.c.b16 %v265, %v264
        %v276 = vpack.c.b16 %v267, %v266
        %v277 = vpack.c.b16 %v269, %v268
        %286 = vmatprep.subr.bf16.mxu0 0
        %287 = vmatpush1.bf16.msra.mxu0 %v270
        %288 = vmatprep.subr.bf16.mxu0 0
        %289 = vmatpush1.bf16.msra.mxu0 %v271
        %290 = vmatprep.subr.bf16.mxu0 0
        %291 = vmatpush1.bf16.msra.mxu0 %v272
        %292 = vmatprep.subr.bf16.mxu0 0
        %293 = vmatpush1.bf16.msra.mxu0 %v273
        %294 = vmatprep.subr.bf16.mxu0 0
        %295 = vmatpush1.bf16.msra.mxu0 %v274
        %296 = vmatprep.subr.bf16.mxu0 0
        %297 = vmatpush1.bf16.msra.mxu0 %v275
        %298 = vmatprep.subr.bf16.mxu0 0
        %299 = vmatpush1.bf16.msra.mxu0 %v276
        %300 = vmatprep.subr.bf16.mxu0 0
        %301 = vmatpush1.bf16.msra.mxu0 %v277
        %302 = vmatprep.subr.bf16.mxu0 0
        %303 = vmatpush1.bf16.msra.mxu0 0
        %304 = vmatprep.subr.bf16.mxu0 0
        %305 = vmatpush1.bf16.msra.mxu0 0
        %306 = vmatprep.subr.bf16.mxu0 0
        %307 = vmatpush1.bf16.msra.mxu0 0
        %308 = vmatprep.subr.bf16.mxu0 0
        %309 = vmatpush1.bf16.msra.mxu0 0
        %310 = vmatprep.subr.bf16.mxu0 0
        %311 = vmatpush1.bf16.msra.mxu0 0
        %312 = vmatprep.subr.bf16.mxu0 0
        %313 = vmatpush1.bf16.msra.mxu0 0
        %314 = vmatprep.subr.bf16.mxu0 0
        %315 = vmatpush1.bf16.msra.mxu0 0
        %316 = vmatprep.subr.bf16.mxu0 0
        %317 = vmatpush1.bf16.msra.mxu0 0
        %318 = vmatprep.mubr.bf16.mxu0 0
        %319 = vmatmul.mubr.bf16.gmra.mrb[0].mxu0 %v236
        %v320 = vpop.f32.mrb[0].mxu0
        %v321 = vadd.f32 %v230, %v320
        %v322 = vpop.f32.mrb[0].mxu0
        %v323 = vpop.f32.mrb[0].mxu0
        %v324 = vadd.f32 %v230, %v323
        %v325 = vpop.f32.mrb[0].mxu0
        %326 = vdwg.mxu0
        %327 = vst [vmem:[%s203] sm:$0xff] %v321
        %328 = vst [vmem:[%s203 + $0x8] sm:$0xff] %v324
        %s329 = sand.u32 %s97, 1
        %s330 = scalar_lea.sflag [#allocation4], %s329
        %s331 = sand.u32 %s97, 1
        %s332 = smul.addr %s331, 16
        %s333 = scalar_lea.vmem [#allocation7], %s332
        // Predicated region
        $region41: #{tpu_custom_call.1} parent=31 // pred_check
          %p334 = pneg %p107
        $region42: #{tpu_custom_call.1} parent=31 // pred_check_branch
          %336 = sbr.rel (%p334) target = $region44
        $region43: #{tpu_custom_call.1} parent=31 // pred_region
          %s337 = smul.u32 2, %s21
          %s339 = ssub.s32 256, 256
          %340 = vsyncadd %s330, %s339
          %s341 = smul.addr %s337, 128
          %s342 = scalar_lea.hbm %s3, %s341
          %s343 = sshll.u32 %s333, 4
          %s344 = int_to_ptr.vmem [resolvable:$true] %s343
          %349 = dma.vmem_to_hbm [thread:$0]  %s344, 256, %s342, %s330, 128, 128, 8
        $region44: #{tpu_custom_call.1} parent=31 // pred_fallthru
          _
      $region32: #{tpu_custom_call.1} parent=5 // pred_fallthru
        _
      %p350 = scmp.le.s32.totalorder 2, %s16
      // Predicated region
      $region45: #{tpu_custom_call.1} parent=5 // pred_check
        %p351 = pneg %p350
      $region46: #{tpu_custom_call.1} parent=5 // pred_check_branch
        %353 = sbr.rel (%p351) target = $region48
      $region47: #{tpu_custom_call.1} parent=5 // pred_region
        %s354 = ssub.s32 %s16, 2
        // Predicated region
        $region49: #{tpu_custom_call.1} parent=47 // pred_check
          %p355 = pneg %p113
        $region50: #{tpu_custom_call.1} parent=47 // pred_check_branch
          %357 = sbr.rel (%p355) target = $region52
        $region51: #{tpu_custom_call.1} parent=47 // pred_region
          %s358 = sand.u32 %s98, 1
          %s359 = scalar_lea.sflag [#allocation4], %s358
          %s360 = sand.u32 %s98, 1
          %s361 = smul.addr %s360, 16
          %s362 = scalar_lea.vmem [#allocation7], %s361
          %363 = dma.done %s359, 256
        $region52: #{tpu_custom_call.1} parent=47 // pred_fallthru
          _
      $region48: #{tpu_custom_call.1} parent=5 // pred_fallthru
        _
    $region6: #{tpu_custom_call.1} parent=1 // loop_footer
      %s20 = sadd.s32 1, %s16
    $region7: #{tpu_custom_call.1} parent=1 // loop_footer_branch
      %15 = sbr.rel target = $region3
    $region8: #{tpu_custom_call.1} parent=1 // loop_exit
      _
    %364 = vsyncpa [#allocation3], 1
    %s365 = scalar_lea.sflag [#allocation3], 1
    %366 = vsyncpa %s365, 1
    %367 = vsyncpa [#allocation6], 1
    %368 = vsyncpa [#allocation4], 1
    %s369 = scalar_lea.sflag [#allocation4], 1
    %370 = vsyncpa %s369, 1

</llo_original>
